<compile_context>
chip_gen: v6e
topology: v6e:2x2x1
jax: 0.10.0
libtpu: 0.0.40
codegen_flags: <defaults>
</compile_context>

<pallas_src>
import functools

import jax
import jax.numpy as jnp
import numpy as np
from jax.experimental import pallas as pl
from jax.experimental.pallas import tpu as pltpu

# ----------------------------- model dims -----------------------------------
BS = 2            # batch size
FEATURE_LEN = 16  # number of features (embedding table rows)
EMB_DIM = 32      # embedding dimension
BIN_LEN = 8       # number of bits in the binary representation
BIN_REPR_LEN = 8  # last dim of the input tensor
BATCH_TILE = 8    # batch rows per grid step (full sublane utilization)


# ------------------------------ Pallas kernel --------------------------------
def cell_encoder_kernel(x_ref, table_ref, out_ref, *, bin_len):
    """x_ref:     (BT, N)             int32  flattened (feature, bit-slot) input
       table_ref: ((1+bin_len)*N, E)  f32    fused [pos_exp ; V0*N ; ... ; V7*N]
       out_ref:   (BT, E)             f32    cell embeddings
    """
    x = x_ref[...]                                       # (BT, N) int32
    nzf = (x != 0).astype(jnp.float32)                   # nonzero mask

    # Fused LHS [nz | bit0 | ... | bit_{K-1}]: VPU-only mask building; each
    # 128-lane block lands on its own vreg column group, so the concat is
    # pure layout (no XLU).  bit_k of x == 0 is all-zero, so no extra
    # nz-masking is needed for the value part.
    cols = [nzf]
    for k in range(bin_len):                             # static unroll, VPU ops
        cols.append(((x >> k) & 1).astype(jnp.float32))
    lhs = jnp.concatenate(cols, axis=1)                  # (BT, (1+K)*N)

    # Single MXU push covers positional + value contributions.
    acc = jnp.dot(lhs, table_ref[...],
                  preferred_element_type=jnp.float32)    # (BT, E)

    # Mean denominator: #nonzero entries per row (one cross-lane reduce of a
    # single vreg).  max(.,1) keeps padded / all-zero rows finite (0 output).
    n = jnp.maximum(jnp.sum(nzf, axis=1, keepdims=True), 1.0)
    out_ref[...] = acc / n


# ------------------------------- glue / wrapper ------------------------------
def _renorm_max_norm(table, max_norm=1.0):
    """PyTorch Embedding(max_norm=...) behaviour: clip row L2 norms."""
    norms = jnp.sqrt(jnp.sum(table * table, axis=1, keepdims=True))
    scale = jnp.where(norms > max_norm, max_norm / norms, 1.0)
    return table * scale


def prepare_tables(pos_table, val_table, *, rep_len=BIN_REPR_LEN,
                   bin_len=BIN_LEN):
    """One-time (hoisted) parameter preprocessing -> fused ((1+K)*N, E) table.

    Row layout matches the kernel's LHS column layout:
      rows [0, N)              : pos_table[f] for n = f*rep_len + l
      rows [N + k*N, N+(k+1)*N): val_table[k] repeated N times (bit k)
    """
    feat_len, _ = pos_table.shape
    n_cols = feat_len * rep_len
    pos_t = _renorm_max_norm(pos_table)
    val_t = _renorm_max_norm(val_table)
    pos_exp = jnp.repeat(pos_t, rep_len, axis=0)               # (N, E)
    val_rep = jnp.repeat(val_t[:bin_len], n_cols, axis=0)      # (K*N, E)
    return jnp.concatenate([pos_exp, val_rep], axis=0)         # ((1+K)*N, E)


def most_simple_cell_encoder(x, fused_table, *, bin_len=BIN_LEN,
                             batch_tile=BATCH_TILE):
    bs, feat_len, rep_len = x.shape
    n_cols = feat_len * rep_len
    emb_dim = fused_table.shape[1]
    assert fused_table.shape[0] == (1 + bin_len) * n_cols

    # Pad batch up to a multiple of the sublane tile; padded rows are all-zero
    # and produce 0 (sliced off below).
    bs_pad = ((bs + batch_tile - 1) // batch_tile) * batch_tile
    x2d = x.reshape(bs, n_cols).astype(jnp.int32)
    if bs_pad != bs:
        x2d = jnp.pad(x2d, ((0, bs_pad - bs), (0, 0)))

    kernel = functools.partial(cell_encoder_kernel, bin_len=bin_len)
    out = pl.pallas_call(
        kernel,
        out_shape=jax.ShapeDtypeStruct((bs_pad, emb_dim), jnp.float32),
        grid=(bs_pad // batch_tile,),
        in_specs=[
            pl.BlockSpec((batch_tile, n_cols), lambda i: (i, 0)),
            # Fused table block index is constant across the grid, so Pallas
            # DMAs it only once.
            pl.BlockSpec(((1 + bin_len) * n_cols, emb_dim), lambda i: (0, 0)),
        ],
        out_specs=pl.BlockSpec((batch_tile, emb_dim), lambda i: (i, 0)),
        compiler_params=pltpu.CompilerParams(
            dimension_semantics=("parallel",)),
    )(x2d, fused_table)
    return out[:bs]


# ------------------------------ pure-JAX reference ---------------------------
def reference(x, pos_table, val_table, *, bin_len=BIN_LEN):
    pos_t = _renorm_max_norm(pos_table)
    val_t = _renorm_max_norm(val_table)
    nz = (x != 0).astype(jnp.float32)                                  # (bs,F,L)
    masks = (2 ** jnp.arange(bin_len, dtype=jnp.int32))
    bits = ((x[..., None] & masks) != 0).astype(jnp.float32)           # (bs,F,L,K)
    pos = jnp.einsum("bfl,fe->be", nz, pos_t)
    val = jnp.einsum("bflk,ke->be", bits * nz[..., None], val_t[:bin_len])
    n = jnp.maximum(nz.sum(axis=(1, 2)), 1.0)[:, None]
    return (pos + val) / n


# ------------------------------------ main -----------------------------------
if __name__ == "__main__":
    key = jax.random.PRNGKey(0)
    k_pos, k_val, k_x = jax.random.split(key, 3)

    # Deterministic parameter init (nn.Embedding / nn.EmbeddingBag: N(0, 1)).
    pos_table = jax.random.normal(k_pos, (FEATURE_LEN, EMB_DIM), jnp.float32)
    val_table = jax.random.normal(k_val, (FEATURE_LEN, EMB_DIM), jnp.float32)

    # Input: (bs, feature_len, bin_repr_len) integer tensor.
    x = jax.random.randint(k_x, (BS, FEATURE_LEN, BIN_REPR_LEN),
                           0, 2 ** BIN_LEN, dtype=jnp.int32)

    # One-time (per-parameter) table preprocessing, hoisted out of the call path.
    fused_table = jax.block_until_ready(prepare_tables(pos_table, val_table))

    encode = jax.jit(most_simple_cell_encoder,
                     static_argnames=("bin_len", "batch_tile"))
    out = jax.block_until_ready(encode(x, fused_table))

    ref = jax.block_until_ready(reference(x, pos_table, val_table))
    np.testing.assert_allclose(np.asarray(out), np.asarray(ref),
                               rtol=1e-5, atol=1e-5)
    assert out.shape == (BS, EMB_DIM) and out.dtype == jnp.float32
    print("KERNEL_OK")
</pallas_src>

<mosaic_0001>
module attributes {stable_mosaic.version = 11 : i64} {
  func.func @cell_encoder_kernel(%arg0: i32, %arg1: memref<8x128xi32, #tpu.memory_space<vmem>>, %arg2: memref<1152x32xf32, #tpu.memory_space<vmem>>, %arg3: memref<8x32xf32, #tpu.memory_space<vmem>>) attributes {dimension_semantics = [#tpu.dimension_semantics<parallel>], iteration_bounds = array<i64: 1>, scalar_prefetch = 0 : i64, scratch_operands = 0 : i64, tpu.core_type = #tpu.core_type<tc>, window_params = [{transform_indices = @transform_0, window_bounds = array<i64: 8, 128>}, {pipeline_mode = #tpu.pipeline_mode<synchronous>, transform_indices = @transform_1, window_bounds = array<i64: 1152, 32>}, {transform_indices = @transform_2, window_bounds = array<i64: 8, 32>}]} {
    %c0 = arith.constant 0 : index
    %c0_0 = arith.constant 0 : index
    %0 = vector.load %arg1[%c0, %c0_0] : memref<8x128xi32, #tpu.memory_space<vmem>>, vector<8x128xi32>
    %c0_i32 = arith.constant 0 : i32
    %1 = vector.broadcast %c0_i32 : i32 to vector<8x128xi32>
    %2 = arith.cmpi ne, %0, %1 : vector<8x128xi32>
    %3 = arith.extui %2 : vector<8x128xi1> to vector<8x128xi32>
    %4 = arith.sitofp %3 : vector<8x128xi32> to vector<8x128xf32>
    %c0_i32_1 = arith.constant 0 : i32
    %5 = vector.broadcast %c0_i32_1 : i32 to vector<8x128xi32>
    %6 = arith.shrsi %0, %5 : vector<8x128xi32>
    %c1_i32 = arith.constant 1 : i32
    %7 = vector.broadcast %c1_i32 : i32 to vector<8x128xi32>
    %8 = arith.andi %6, %7 : vector<8x128xi32>
    %9 = arith.sitofp %8 : vector<8x128xi32> to vector<8x128xf32>
    %c1_i32_2 = arith.constant 1 : i32
    %10 = vector.broadcast %c1_i32_2 : i32 to vector<8x128xi32>
    %11 = arith.shrsi %0, %10 : vector<8x128xi32>
    %c1_i32_3 = arith.constant 1 : i32
    %12 = vector.broadcast %c1_i32_3 : i32 to vector<8x128xi32>
    %13 = arith.andi %11, %12 : vector<8x128xi32>
    %14 = arith.sitofp %13 : vector<8x128xi32> to vector<8x128xf32>
    %c2_i32 = arith.constant 2 : i32
    %15 = vector.broadcast %c2_i32 : i32 to vector<8x128xi32>
    %16 = arith.shrsi %0, %15 : vector<8x128xi32>
    %c1_i32_4 = arith.constant 1 : i32
    %17 = vector.broadcast %c1_i32_4 : i32 to vector<8x128xi32>
    %18 = arith.andi %16, %17 : vector<8x128xi32>
    %19 = arith.sitofp %18 : vector<8x128xi32> to vector<8x128xf32>
    %c3_i32 = arith.constant 3 : i32
    %20 = vector.broadcast %c3_i32 : i32 to vector<8x128xi32>
    %21 = arith.shrsi %0, %20 : vector<8x128xi32>
    %c1_i32_5 = arith.constant 1 : i32
    %22 = vector.broadcast %c1_i32_5 : i32 to vector<8x128xi32>
    %23 = arith.andi %21, %22 : vector<8x128xi32>
    %24 = arith.sitofp %23 : vector<8x128xi32> to vector<8x128xf32>
    %c4_i32 = arith.constant 4 : i32
    %25 = vector.broadcast %c4_i32 : i32 to vector<8x128xi32>
    %26 = arith.shrsi %0, %25 : vector<8x128xi32>
    %c1_i32_6 = arith.constant 1 : i32
    %27 = vector.broadcast %c1_i32_6 : i32 to vector<8x128xi32>
    %28 = arith.andi %26, %27 : vector<8x128xi32>
    %29 = arith.sitofp %28 : vector<8x128xi32> to vector<8x128xf32>
    %c5_i32 = arith.constant 5 : i32
    %30 = vector.broadcast %c5_i32 : i32 to vector<8x128xi32>
    %31 = arith.shrsi %0, %30 : vector<8x128xi32>
    %c1_i32_7 = arith.constant 1 : i32
    %32 = vector.broadcast %c1_i32_7 : i32 to vector<8x128xi32>
    %33 = arith.andi %31, %32 : vector<8x128xi32>
    %34 = arith.sitofp %33 : vector<8x128xi32> to vector<8x128xf32>
    %c6_i32 = arith.constant 6 : i32
    %35 = vector.broadcast %c6_i32 : i32 to vector<8x128xi32>
    %36 = arith.shrsi %0, %35 : vector<8x128xi32>
    %c1_i32_8 = arith.constant 1 : i32
    %37 = vector.broadcast %c1_i32_8 : i32 to vector<8x128xi32>
    %38 = arith.andi %36, %37 : vector<8x128xi32>
    %39 = arith.sitofp %38 : vector<8x128xi32> to vector<8x128xf32>
    %c7_i32 = arith.constant 7 : i32
    %40 = vector.broadcast %c7_i32 : i32 to vector<8x128xi32>
    %41 = arith.shrsi %0, %40 : vector<8x128xi32>
    %c1_i32_9 = arith.constant 1 : i32
    %42 = vector.broadcast %c1_i32_9 : i32 to vector<8x128xi32>
    %43 = arith.andi %41, %42 : vector<8x128xi32>
    %44 = arith.sitofp %43 : vector<8x128xi32> to vector<8x128xf32>
    %45 = tpu.concatenate %4, %9, %14, %19, %24, %29, %34, %39, %44 in 1 : vector<8x128xf32>, vector<8x128xf32>, vector<8x128xf32>, vector<8x128xf32>, vector<8x128xf32>, vector<8x128xf32>, vector<8x128xf32>, vector<8x128xf32>, vector<8x128xf32> -> vector<8x1152xf32>
    %c0_10 = arith.constant 0 : index
    %c0_11 = arith.constant 0 : index
    %46 = vector.load %arg2[%c0_10, %c0_11] : memref<1152x32xf32, #tpu.memory_space<vmem>>, vector<1152x32xf32>
    %cst = arith.constant dense<0.000000e+00> : vector<8x32xf32>
    %47 = tpu.matmul %45, %46, %cst {dimension_numbers = #tpu.dot_dimension_numbers<[1], [0], [0], [1], [0, 0, 1, 1], [], []>} : vector<8x1152xf32>, vector<1152x32xf32>, vector<8x32xf32> -> vector<8x32xf32>
    %cst_12 = arith.constant dense<0.000000e+00> : vector<8xf32>
    %48 = vector.multi_reduction <add>, %4, %cst_12 [1] : vector<8x128xf32> to vector<8xf32>
    %49 = vector.shape_cast %48 : vector<8xf32> to vector<8x1xf32>
    %cst_13 = arith.constant 1.000000e+00 : f32
    %50 = vector.broadcast %cst_13 : f32 to vector<8x1xf32>
    %51 = arith.maximumf %49, %50 : vector<8x1xf32>
    %52 = vector.broadcast %51 : vector<8x1xf32> to vector<8x32xf32>
    %53 = arith.divf %47, %52 : vector<8x32xf32>
    %c0_14 = arith.constant 0 : index
    %c0_15 = arith.constant 0 : index
    %54 = vector.load %arg3[%c0_14, %c0_15] : memref<8x32xf32, #tpu.memory_space<vmem>>, vector<8x32xf32>
    tpu.vector_store %arg3[%c0_14, %c0_15], %53 {strides = array<i32>} : memref<8x32xf32, #tpu.memory_space<vmem>>, vector<8x32xf32>,
    return
  }
  func.func @transform_0(%arg0: i32) -> (i32, i32) {
    %c0_i32 = arith.constant 0 : i32
    %c0_i32_0 = arith.constant 0 : i32
    return %arg0, %c0_i32 : i32, i32
  }
  func.func @transform_1(%arg0: i32) -> (i32, i32) {
    %c0_i32 = arith.constant 0 : i32
    %c0_i32_0 = arith.constant 0 : i32
    %c0_i32_1 = arith.constant 0 : i32
    return %c0_i32, %c0_i32_0 : i32, i32
  }
  func.func @transform_2(%arg0: i32) -> (i32, i32) {
    %c0_i32 = arith.constant 0 : i32
    %c0_i32_0 = arith.constant 0 : i32
    return %arg0, %c0_i32 : i32, i32
  }
}

</mosaic_0001>

<llo_original>
// kernel: most_simple_cell_encoder.1
$region0: #{most_simple_cell_encoder.1}
  #allocation0 [shape = 'u32[]', space=smem, size = 0x4, offset = 0x4, fixed_abs, tag = 'smem constant byte address 0x4 - core index']
  #allocation1 [shape = 'u32[144,128]{1,0:T(1,128)}', space=vmem, size = 0x12000, scoped, tag = 'internal scratch']
  %s0 = inlined_call_operand.vmem [shape: s32[8,128], index: 0, kind: input, shape index: {}]
  %s1 = inlined_call_operand.vmem [shape: f32[1152,32], index: 1, kind: input, shape index: {}]
  %s2 = inlined_call_operand.vmem [shape: f32[8,32], index: 2, kind: output, shape index: {}]
  %s3 = sld [smem:[#allocation0]]
  $region18: #{most_simple_cell_encoder.1} parent=0
    _
  %s5 = ssub.s32 1, %s3
  %s6 = scalar_select 0, %s5, %s3
  // Predicated region
  $region2: #{most_simple_cell_encoder.1} parent=0 // pred_check
    _
  $region3: #{most_simple_cell_encoder.1} parent=0 // pred_check_branch
    %8 = sbr.rel (0) target = $region5
  $region4: #{most_simple_cell_encoder.1} parent=0 // pred_region
    _
  $region5: #{most_simple_cell_encoder.1} parent=0 // pred_fallthru
    _
  // Predicated region
  $region6: #{most_simple_cell_encoder.1} parent=0 // pred_check
    _
  $region7: #{most_simple_cell_encoder.1} parent=0 // pred_check_branch
    %10 = sbr.rel (0) target = $region9
  $region8: #{most_simple_cell_encoder.1} parent=0 // pred_region
    _
  $region9: #{most_simple_cell_encoder.1} parent=0 // pred_fallthru
    _
  %v11 = vld [vmem:[%s0] sm:$0xff]
  %vm12 = vcmp.ne.s32.totalorder %v11, 0
  %v13 = vsel %vm12, 1, 0
  %v14 = vcvt.s32.f32 %v13
  %v15 = vand.u32 %v11, 1
  %v16 = vcvt.s32.f32 %v15
  %v17 = vshra.s32 %v11, 1
  %v18 = vand.u32 %v17, 1
  %v19 = vcvt.s32.f32 %v18
  %v20 = vshra.s32 %v11, 2
  %v21 = vand.u32 %v20, 1
  %v22 = vcvt.s32.f32 %v21
  %v23 = vshra.s32 %v11, 3
  %v24 = vand.u32 %v23, 1
  %v25 = vcvt.s32.f32 %v24
  %v26 = vshra.s32 %v11, 4
  %v27 = vand.u32 %v26, 1
  %v28 = vcvt.s32.f32 %v27
  %v29 = vshra.s32 %v11, 5
  %v30 = vand.u32 %v29, 1
  %v31 = vcvt.s32.f32 %v30
  %v32 = vshra.s32 %v11, 6
  %v33 = vand.u32 %v32, 1
  %v34 = vcvt.s32.f32 %v33
  %v35 = vshra.s32 %v11, 7
  %v36 = vand.u32 %v35, 1
  %v37 = vcvt.s32.f32 %v36
  %v38 = vld [vmem:[%s1] sm:$0xff]
  %v39 = vld [vmem:[%s1 + $0x8] sm:$0xff]
  %v40 = vld [vmem:[%s1 + $0x10] sm:$0xff]
  %v41 = vld [vmem:[%s1 + $0x18] sm:$0xff]
  %v42 = vld [vmem:[%s1 + $0x20] sm:$0xff]
  %v43 = vld [vmem:[%s1 + $0x28] sm:$0xff]
  %v44 = vld [vmem:[%s1 + $0x30] sm:$0xff]
  %v45 = vld [vmem:[%s1 + $0x38] sm:$0xff]
  %v46 = vld [vmem:[%s1 + $0x40] sm:$0xff]
  %v47 = vld [vmem:[%s1 + $0x48] sm:$0xff]
  %v48 = vld [vmem:[%s1 + $0x50] sm:$0xff]
  %v49 = vld [vmem:[%s1 + $0x58] sm:$0xff]
  %v50 = vld [vmem:[%s1 + $0x60] sm:$0xff]
  %v51 = vld [vmem:[%s1 + $0x68] sm:$0xff]
  %v52 = vld [vmem:[%s1 + $0x70] sm:$0xff]
  %v53 = vld [vmem:[%s1 + $0x78] sm:$0xff]
  %v54 = vld [vmem:[%s1 + $0x80] sm:$0xff]
  %v55 = vld [vmem:[%s1 + $0x88] sm:$0xff]
  %v56 = vld [vmem:[%s1 + $0x90] sm:$0xff]
  %v57 = vld [vmem:[%s1 + $0x98] sm:$0xff]
  %v58 = vld [vmem:[%s1 + $0xa0] sm:$0xff]
  %v59 = vld [vmem:[%s1 + $0xa8] sm:$0xff]
  %v60 = vld [vmem:[%s1 + $0xb0] sm:$0xff]
  %v61 = vld [vmem:[%s1 + $0xb8] sm:$0xff]
  %v62 = vld [vmem:[%s1 + $0xc0] sm:$0xff]
  %v63 = vld [vmem:[%s1 + $0xc8] sm:$0xff]
  %v64 = vld [vmem:[%s1 + $0xd0] sm:$0xff]
  %v65 = vld [vmem:[%s1 + $0xd8] sm:$0xff]
  %v66 = vld [vmem:[%s1 + $0xe0] sm:$0xff]
  %v67 = vld [vmem:[%s1 + $0xe8] sm:$0xff]
  %v68 = vld [vmem:[%s1 + $0xf0] sm:$0xff]
  %v69 = vld [vmem:[%s1 + $0xf8] sm:$0xff]
  %v70 = vld [vmem:[%s1 + $0x100] sm:$0xff]
  %v71 = vld [vmem:[%s1 + $0x108] sm:$0xff]
  %v72 = vld [vmem:[%s1 + $0x110] sm:$0xff]
  %v73 = vld [vmem:[%s1 + $0x118] sm:$0xff]
  %v74 = vld [vmem:[%s1 + $0x120] sm:$0xff]
  %v75 = vld [vmem:[%s1 + $0x128] sm:$0xff]
  %v76 = vld [vmem:[%s1 + $0x130] sm:$0xff]
  %v77 = vld [vmem:[%s1 + $0x138] sm:$0xff]
  %v78 = vld [vmem:[%s1 + $0x140] sm:$0xff]
  %v79 = vld [vmem:[%s1 + $0x148] sm:$0xff]
  %v80 = vld [vmem:[%s1 + $0x150] sm:$0xff]
  %v81 = vld [vmem:[%s1 + $0x158] sm:$0xff]
  %v82 = vld [vmem:[%s1 + $0x160] sm:$0xff]
  %v83 = vld [vmem:[%s1 + $0x168] sm:$0xff]
  %v84 = vld [vmem:[%s1 + $0x170] sm:$0xff]
  %v85 = vld [vmem:[%s1 + $0x178] sm:$0xff]
  %v86 = vld [vmem:[%s1 + $0x180] sm:$0xff]
  %v87 = vld [vmem:[%s1 + $0x188] sm:$0xff]
  %v88 = vld [vmem:[%s1 + $0x190] sm:$0xff]
  %v89 = vld [vmem:[%s1 + $0x198] sm:$0xff]
  %v90 = vld [vmem:[%s1 + $0x1a0] sm:$0xff]
  %v91 = vld [vmem:[%s1 + $0x1a8] sm:$0xff]
  %v92 = vld [vmem:[%s1 + $0x1b0] sm:$0xff]
  %v93 = vld [vmem:[%s1 + $0x1b8] sm:$0xff]
  %v94 = vld [vmem:[%s1 + $0x1c0] sm:$0xff]
  %v95 = vld [vmem:[%s1 + $0x1c8] sm:$0xff]
  %v96 = vld [vmem:[%s1 + $0x1d0] sm:$0xff]
  %v97 = vld [vmem:[%s1 + $0x1d8] sm:$0xff]
  %v98 = vld [vmem:[%s1 + $0x1e0] sm:$0xff]
  %v99 = vld [vmem:[%s1 + $0x1e8] sm:$0xff]
  %v100 = vld [vmem:[%s1 + $0x1f0] sm:$0xff]
  %v101 = vld [vmem:[%s1 + $0x1f8] sm:$0xff]
  %v102 = vld [vmem:[%s1 + $0x200] sm:$0xff]
  %v103 = vld [vmem:[%s1 + $0x208] sm:$0xff]
  %v104 = vld [vmem:[%s1 + $0x210] sm:$0xff]
  %v105 = vld [vmem:[%s1 + $0x218] sm:$0xff]
  %v106 = vld [vmem:[%s1 + $0x220] sm:$0xff]
  %v107 = vld [vmem:[%s1 + $0x228] sm:$0xff]
  %v108 = vld [vmem:[%s1 + $0x230] sm:$0xff]
  %v109 = vld [vmem:[%s1 + $0x238] sm:$0xff]
  %v110 = vld [vmem:[%s1 + $0x240] sm:$0xff]
  %v111 = vld [vmem:[%s1 + $0x248] sm:$0xff]
  %v112 = vld [vmem:[%s1 + $0x250] sm:$0xff]
  %v113 = vld [vmem:[%s1 + $0x258] sm:$0xff]
  %v114 = vld [vmem:[%s1 + $0x260] sm:$0xff]
  %v115 = vld [vmem:[%s1 + $0x268] sm:$0xff]
  %v116 = vld [vmem:[%s1 + $0x270] sm:$0xff]
  %v117 = vld [vmem:[%s1 + $0x278] sm:$0xff]
  %v118 = vld [vmem:[%s1 + $0x280] sm:$0xff]
  %v119 = vld [vmem:[%s1 + $0x288] sm:$0xff]
  %v120 = vld [vmem:[%s1 + $0x290] sm:$0xff]
  %v121 = vld [vmem:[%s1 + $0x298] sm:$0xff]
  %v122 = vld [vmem:[%s1 + $0x2a0] sm:$0xff]
  %v123 = vld [vmem:[%s1 + $0x2a8] sm:$0xff]
  %v124 = vld [vmem:[%s1 + $0x2b0] sm:$0xff]
  %v125 = vld [vmem:[%s1 + $0x2b8] sm:$0xff]
  %v126 = vld [vmem:[%s1 + $0x2c0] sm:$0xff]
  %v127 = vld [vmem:[%s1 + $0x2c8] sm:$0xff]
  %v128 = vld [vmem:[%s1 + $0x2d0] sm:$0xff]
  %v129 = vld [vmem:[%s1 + $0x2d8] sm:$0xff]
  %v130 = vld [vmem:[%s1 + $0x2e0] sm:$0xff]
  %v131 = vld [vmem:[%s1 + $0x2e8] sm:$0xff]
  %v132 = vld [vmem:[%s1 + $0x2f0] sm:$0xff]
  %v133 = vld [vmem:[%s1 + $0x2f8] sm:$0xff]
  %v134 = vld [vmem:[%s1 + $0x300] sm:$0xff]
  %v135 = vld [vmem:[%s1 + $0x308] sm:$0xff]
  %v136 = vld [vmem:[%s1 + $0x310] sm:$0xff]
  %v137 = vld [vmem:[%s1 + $0x318] sm:$0xff]
  %v138 = vld [vmem:[%s1 + $0x320] sm:$0xff]
  %v139 = vld [vmem:[%s1 + $0x328] sm:$0xff]
  %v140 = vld [vmem:[%s1 + $0x330] sm:$0xff]
  %v141 = vld [vmem:[%s1 + $0x338] sm:$0xff]
  %v142 = vld [vmem:[%s1 + $0x340] sm:$0xff]
  %v143 = vld [vmem:[%s1 + $0x348] sm:$0xff]
  %v144 = vld [vmem:[%s1 + $0x350] sm:$0xff]
  %v145 = vld [vmem:[%s1 + $0x358] sm:$0xff]
  %v146 = vld [vmem:[%s1 + $0x360] sm:$0xff]
  %v147 = vld [vmem:[%s1 + $0x368] sm:$0xff]
  %v148 = vld [vmem:[%s1 + $0x370] sm:$0xff]
  %v149 = vld [vmem:[%s1 + $0x378] sm:$0xff]
  %v150 = vld [vmem:[%s1 + $0x380] sm:$0xff]
  %v151 = vld [vmem:[%s1 + $0x388] sm:$0xff]
  %v152 = vld [vmem:[%s1 + $0x390] sm:$0xff]
  %v153 = vld [vmem:[%s1 + $0x398] sm:$0xff]
  %v154 = vld [vmem:[%s1 + $0x3a0] sm:$0xff]
  %v155 = vld [vmem:[%s1 + $0x3a8] sm:$0xff]
  %v156 = vld [vmem:[%s1 + $0x3b0] sm:$0xff]
  %v157 = vld [vmem:[%s1 + $0x3b8] sm:$0xff]
  %v158 = vld [vmem:[%s1 + $0x3c0] sm:$0xff]
  %v159 = vld [vmem:[%s1 + $0x3c8] sm:$0xff]
  %v160 = vld [vmem:[%s1 + $0x3d0] sm:$0xff]
  %v161 = vld [vmem:[%s1 + $0x3d8] sm:$0xff]
  %v162 = vld [vmem:[%s1 + $0x3e0] sm:$0xff]
  %v163 = vld [vmem:[%s1 + $0x3e8] sm:$0xff]
  %v164 = vld [vmem:[%s1 + $0x3f0] sm:$0xff]
  %v165 = vld [vmem:[%s1 + $0x3f8] sm:$0xff]
  %v166 = vld [vmem:[%s1 + $0x400] sm:$0xff]
  %v167 = vld [vmem:[%s1 + $0x408] sm:$0xff]
  %v168 = vld [vmem:[%s1 + $0x410] sm:$0xff]
  %v169 = vld [vmem:[%s1 + $0x418] sm:$0xff]
  %v170 = vld [vmem:[%s1 + $0x420] sm:$0xff]
  %v171 = vld [vmem:[%s1 + $0x428] sm:$0xff]
  %v172 = vld [vmem:[%s1 + $0x430] sm:$0xff]
  %v173 = vld [vmem:[%s1 + $0x438] sm:$0xff]
  %v174 = vld [vmem:[%s1 + $0x440] sm:$0xff]
  %v175 = vld [vmem:[%s1 + $0x448] sm:$0xff]
  %v176 = vld [vmem:[%s1 + $0x450] sm:$0xff]
  %v177 = vld [vmem:[%s1 + $0x458] sm:$0xff]
  %v178 = vld [vmem:[%s1 + $0x460] sm:$0xff]
  %v179 = vld [vmem:[%s1 + $0x468] sm:$0xff]
  %v180 = vld [vmem:[%s1 + $0x470] sm:$0xff]
  %v181 = vld [vmem:[%s1 + $0x478] sm:$0xff]
  %182 = vmatprep.subr.mxu0 0.0
  %183 = vmatpush1.msra.mxu0 %v53
  %184 = vmatprep.subr.mxu0 0.0
  %185 = vmatpush1.msra.mxu0 %v52
  %186 = vmatprep.subr.mxu0 0.0
  %187 = vmatpush1.msra.mxu0 %v51
  %188 = vmatprep.subr.mxu0 0.0
  %189 = vmatpush1.msra.mxu0 %v50
  %190 = vmatprep.subr.mxu0 0.0
  %191 = vmatpush1.msra.mxu0 %v49
  %192 = vmatprep.subr.mxu0 0.0
  %193 = vmatpush1.msra.mxu0 %v48
  %194 = vmatprep.subr.mxu0 0.0
  %195 = vmatpush1.msra.mxu0 %v47
  %196 = vmatprep.subr.mxu0 0.0
  %197 = vmatpush1.msra.mxu0 %v46
  %198 = vmatprep.subr.mxu0 0.0
  %199 = vmatpush1.msra.mxu0 %v45
  %200 = vmatprep.subr.mxu0 0.0
  %201 = vmatpush1.msra.mxu0 %v44
  %202 = vmatprep.subr.mxu0 0.0
  %203 = vmatpush1.msra.mxu0 %v43
  %204 = vmatprep.subr.mxu0 0.0
  %205 = vmatpush1.msra.mxu0 %v42
  %206 = vmatprep.subr.mxu0 0.0
  %207 = vmatpush1.msra.mxu0 %v41
  %208 = vmatprep.subr.mxu0 0.0
  %209 = vmatpush1.msra.mxu0 %v40
  %210 = vmatprep.subr.mxu0 0.0
  %211 = vmatpush1.msra.mxu0 %v39
  %212 = vmatprep.subr.mxu0 0.0
  %213 = vmatpush1.msra.mxu0 %v38
  %214 = vmatprep.subr.mxu0 0.0
  %215 = vmatpush2.msra.mxu0 %v69
  %216 = vmatprep.subr.mxu0 0.0
  %217 = vmatpush2.msra.mxu0 %v68
  %218 = vmatprep.subr.mxu0 0.0
  %219 = vmatpush2.msra.mxu0 %v67
  %220 = vmatprep.subr.mxu0 0.0
  %221 = vmatpush2.msra.mxu0 %v66
  %222 = vmatprep.subr.mxu0 0.0
  %223 = vmatpush2.msra.mxu0 %v65
  %224 = vmatprep.subr.mxu0 0.0
  %225 = vmatpush2.msra.mxu0 %v64
  %226 = vmatprep.subr.mxu0 0.0
  %227 = vmatpush2.msra.mxu0 %v63
  %228 = vmatprep.subr.mxu0 0.0
  %229 = vmatpush2.msra.mxu0 %v62
  %230 = vmatprep.subr.mxu0 0.0
  %231 = vmatpush2.msra.mxu0 %v61
  %232 = vmatprep.subr.mxu0 0.0
  %233 = vmatpush2.msra.mxu0 %v60
  %234 = vmatprep.subr.mxu0 0.0
  %235 = vmatpush2.msra.mxu0 %v59
  %236 = vmatprep.subr.mxu0 0.0
  %237 = vmatpush2.msra.mxu0 %v58
  %238 = vmatprep.subr.mxu0 0.0
  %239 = vmatpush2.msra.mxu0 %v57
  %240 = vmatprep.subr.mxu0 0.0
  %241 = vmatpush2.msra.mxu0 %v56
  %242 = vmatprep.subr.mxu0 0.0
  %243 = vmatpush2.msra.mxu0 %v55
  %244 = vmatprep.subr.mxu0 0.0
  %245 = vmatpush2.msra.mxu0 %v54
  %246 = vmatprep.mubr.f32.mxu0 %v16
  %247 = vmatmul.mubr.f32.gmra.mxu0 %v14
  %v248 = vpop.f32.mrf.mxu0
  %v249 = vadd.f32 0.0, %v248
  %v250 = vpop.f32.mrf.mxu0
  %251 = vdwg.mxu0
  %252 = vmatprep.subr.mxu0 0.0
  %253 = vmatpush1.msra.mxu0 %v85
  %254 = vmatprep.subr.mxu0 0.0
  %255 = vmatpush1.msra.mxu0 %v84
  %256 = vmatprep.subr.mxu0 0.0
  %257 = vmatpush1.msra.mxu0 %v83
  %258 = vmatprep.subr.mxu0 0.0
  %259 = vmatpush1.msra.mxu0 %v82
  %260 = vmatprep.subr.mxu0 0.0
  %261 = vmatpush1.msra.mxu0 %v81
  %262 = vmatprep.subr.mxu0 0.0
  %263 = vmatpush1.msra.mxu0 %v80
  %264 = vmatprep.subr.mxu0 0.0
  %265 = vmatpush1.msra.mxu0 %v79
  %266 = vmatprep.subr.mxu0 0.0
  %267 = vmatpush1.msra.mxu0 %v78
  %268 = vmatprep.subr.mxu0 0.0
  %269 = vmatpush1.msra.mxu0 %v77
  %270 = vmatprep.subr.mxu0 0.0
  %271 = vmatpush1.msra.mxu0 %v76
  %272 = vmatprep.subr.mxu0 0.0
  %273 = vmatpush1.msra.mxu0 %v75
  %274 = vmatprep.subr.mxu0 0.0
  %275 = vmatpush1.msra.mxu0 %v74
  %276 = vmatprep.subr.mxu0 0.0
  %277 = vmatpush1.msra.mxu0 %v73
  %278 = vmatprep.subr.mxu0 0.0
  %279 = vmatpush1.msra.mxu0 %v72
  %280 = vmatprep.subr.mxu0 0.0
  %281 = vmatpush1.msra.mxu0 %v71
  %282 = vmatprep.subr.mxu0 0.0
  %283 = vmatpush1.msra.mxu0 %v70
  %284 = vmatprep.subr.mxu0 0.0
  %285 = vmatpush2.msra.mxu0 %v101
  %286 = vmatprep.subr.mxu0 0.0
  %287 = vmatpush2.msra.mxu0 %v100
  %288 = vmatprep.subr.mxu0 0.0
  %289 = vmatpush2.msra.mxu0 %v99
  %290 = vmatprep.subr.mxu0 0.0
  %291 = vmatpush2.msra.mxu0 %v98
  %292 = vmatprep.subr.mxu0 0.0
  %293 = vmatpush2.msra.mxu0 %v97
  %294 = vmatprep.subr.mxu0 0.0
  %295 = vmatpush2.msra.mxu0 %v96
  %296 = vmatprep.subr.mxu0 0.0
  %297 = vmatpush2.msra.mxu0 %v95
  %298 = vmatprep.subr.mxu0 0.0
  %299 = vmatpush2.msra.mxu0 %v94
  %300 = vmatprep.subr.mxu0 0.0
  %301 = vmatpush2.msra.mxu0 %v93
  %302 = vmatprep.subr.mxu0 0.0
  %303 = vmatpush2.msra.mxu0 %v92
  %304 = vmatprep.subr.mxu0 0.0
  %305 = vmatpush2.msra.mxu0 %v91
  %306 = vmatprep.subr.mxu0 0.0
  %307 = vmatpush2.msra.mxu0 %v90
  %308 = vmatprep.subr.mxu0 0.0
  %309 = vmatpush2.msra.mxu0 %v89
  %310 = vmatprep.subr.mxu0 0.0
  %311 = vmatpush2.msra.mxu0 %v88
  %312 = vmatprep.subr.mxu0 0.0
  %313 = vmatpush2.msra.mxu0 %v87
  %314 = vmatprep.subr.mxu0 0.0
  %315 = vmatpush2.msra.mxu0 %v86
  %316 = vmatprep.mubr.f32.mxu0 %v22
  %317 = vmatmul.mubr.f32.gmra.mxu0 %v19
  %v318 = vpop.f32.mrf.mxu0
  %v319 = vadd.f32 %v249, %v318
  %v320 = vpop.f32.mrf.mxu0
  %321 = vdwg.mxu0
  %322 = vmatprep.subr.mxu0 0.0
  %323 = vmatpush1.msra.mxu0 %v117
  %324 = vmatprep.subr.mxu0 0.0
  %325 = vmatpush1.msra.mxu0 %v116
  %326 = vmatprep.subr.mxu0 0.0
  %327 = vmatpush1.msra.mxu0 %v115
  %328 = vmatprep.subr.mxu0 0.0
  %329 = vmatpush1.msra.mxu0 %v114
  %330 = vmatprep.subr.mxu0 0.0
  %331 = vmatpush1.msra.mxu0 %v113
  %332 = vmatprep.subr.mxu0 0.0
  %333 = vmatpush1.msra.mxu0 %v112
  %334 = vmatprep.subr.mxu0 0.0
  %335 = vmatpush1.msra.mxu0 %v111
  %336 = vmatprep.subr.mxu0 0.0
  %337 = vmatpush1.msra.mxu0 %v110
  %338 = vmatprep.subr.mxu0 0.0
  %339 = vmatpush1.msra.mxu0 %v109
  %340 = vmatprep.subr.mxu0 0.0
  %341 = vmatpush1.msra.mxu0 %v108
  %342 = vmatprep.subr.mxu0 0.0
  %343 = vmatpush1.msra.mxu0 %v107
  %344 = vmatprep.subr.mxu0 0.0
  %345 = vmatpush1.msra.mxu0 %v106
  %346 = vmatprep.subr.mxu0 0.0
  %347 = vmatpush1.msra.mxu0 %v105
  %348 = vmatprep.subr.mxu0 0.0
  %349 = vmatpush1.msra.mxu0 %v104
  %350 = vmatprep.subr.mxu0 0.0
  %351 = vmatpush1.msra.mxu0 %v103
  %352 = vmatprep.subr.mxu0 0.0
  %353 = vmatpush1.msra.mxu0 %v102
  %354 = vmatprep.subr.mxu0 0.0
  %355 = vmatpush2.msra.mxu0 %v133
  %356 = vmatprep.subr.mxu0 0.0
  %357 = vmatpush2.msra.mxu0 %v132
  %358 = vmatprep.subr.mxu0 0.0
  %359 = vmatpush2.msra.mxu0 %v131
  %360 = vmatprep.subr.mxu0 0.0
  %361 = vmatpush2.msra.mxu0 %v130
  %362 = vmatprep.subr.mxu0 0.0
  %363 = vmatpush2.msra.mxu0 %v129
  %364 = vmatprep.subr.mxu0 0.0
  %365 = vmatpush2.msra.mxu0 %v128
  %366 = vmatprep.subr.mxu0 0.0
  %367 = vmatpush2.msra.mxu0 %v127
  %368 = vmatprep.subr.mxu0 0.0
  %369 = vmatpush2.msra.mxu0 %v126
  %370 = vmatprep.subr.mxu0 0.0
  %371 = vmatpush2.msra.mxu0 %v125
  %372 = vmatprep.subr.mxu0 0.0
  %373 = vmatpush2.msra.mxu0 %v124
  %374 = vmatprep.subr.mxu0 0.0
  %375 = vmatpush2.msra.mxu0 %v123
  %376 = vmatprep.subr.mxu0 0.0
  %377 = vmatpush2.msra.mxu0 %v122
  %378 = vmatprep.subr.mxu0 0.0
  %379 = vmatpush2.msra.mxu0 %v121
  %380 = vmatprep.subr.mxu0 0.0
  %381 = vmatpush2.msra.mxu0 %v120
  %382 = vmatprep.subr.mxu0 0.0
  %383 = vmatpush2.msra.mxu0 %v119
  %384 = vmatprep.subr.mxu0 0.0
  %385 = vmatpush2.msra.mxu0 %v118
  %386 = vmatprep.mubr.f32.mxu0 %v28
  %387 = vmatmul.mubr.f32.gmra.mxu0 %v25
  %v388 = vpop.f32.mrf.mxu0
  %v389 = vadd.f32 %v319, %v388
  %v390 = vpop.f32.mrf.mxu0
  %391 = vdwg.mxu0
  %392 = vmatprep.subr.mxu0 0.0
  %393 = vmatpush1.msra.mxu0 %v149
  %394 = vmatprep.subr.mxu0 0.0
  %395 = vmatpush1.msra.mxu0 %v148
  %396 = vmatprep.subr.mxu0 0.0
  %397 = vmatpush1.msra.mxu0 %v147
  %398 = vmatprep.subr.mxu0 0.0
  %399 = vmatpush1.msra.mxu0 %v146
  %400 = vmatprep.subr.mxu0 0.0
  %401 = vmatpush1.msra.mxu0 %v145
  %402 = vmatprep.subr.mxu0 0.0
  %403 = vmatpush1.msra.mxu0 %v144
  %404 = vmatprep.subr.mxu0 0.0
  %405 = vmatpush1.msra.mxu0 %v143
  %406 = vmatprep.subr.mxu0 0.0
  %407 = vmatpush1.msra.mxu0 %v142
  %408 = vmatprep.subr.mxu0 0.0
  %409 = vmatpush1.msra.mxu0 %v141
  %410 = vmatprep.subr.mxu0 0.0
  %411 = vmatpush1.msra.mxu0 %v140
  %412 = vmatprep.subr.mxu0 0.0
  %413 = vmatpush1.msra.mxu0 %v139
  %414 = vmatprep.subr.mxu0 0.0
  %415 = vmatpush1.msra.mxu0 %v138
  %416 = vmatprep.subr.mxu0 0.0
  %417 = vmatpush1.msra.mxu0 %v137
  %418 = vmatprep.subr.mxu0 0.0
  %419 = vmatpush1.msra.mxu0 %v136
  %420 = vmatprep.subr.mxu0 0.0
  %421 = vmatpush1.msra.mxu0 %v135
  %422 = vmatprep.subr.mxu0 0.0
  %423 = vmatpush1.msra.mxu0 %v134
  %424 = vmatprep.subr.mxu0 0.0
  %425 = vmatpush2.msra.mxu0 %v165
  %426 = vmatprep.subr.mxu0 0.0
  %427 = vmatpush2.msra.mxu0 %v164
  %428 = vmatprep.subr.mxu0 0.0
  %429 = vmatpush2.msra.mxu0 %v163
  %430 = vmatprep.subr.mxu0 0.0
  %431 = vmatpush2.msra.mxu0 %v162
  %432 = vmatprep.subr.mxu0 0.0
  %433 = vmatpush2.msra.mxu0 %v161
  %434 = vmatprep.subr.mxu0 0.0
  %435 = vmatpush2.msra.mxu0 %v160
  %436 = vmatprep.subr.mxu0 0.0
  %437 = vmatpush2.msra.mxu0 %v159
  %438 = vmatprep.subr.mxu0 0.0
  %439 = vmatpush2.msra.mxu0 %v158
  %440 = vmatprep.subr.mxu0 0.0
  %441 = vmatpush2.msra.mxu0 %v157
  %442 = vmatprep.subr.mxu0 0.0
  %443 = vmatpush2.msra.mxu0 %v156
  %444 = vmatprep.subr.mxu0 0.0
  %445 = vmatpush2.msra.mxu0 %v155
  %446 = vmatprep.subr.mxu0 0.0
  %447 = vmatpush2.msra.mxu0 %v154
  %448 = vmatprep.subr.mxu0 0.0
  %449 = vmatpush2.msra.mxu0 %v153
  %450 = vmatprep.subr.mxu0 0.0
  %451 = vmatpush2.msra.mxu0 %v152
  %452 = vmatprep.subr.mxu0 0.0
  %453 = vmatpush2.msra.mxu0 %v151
  %454 = vmatprep.subr.mxu0 0.0
  %455 = vmatpush2.msra.mxu0 %v150
  %456 = vmatprep.mubr.f32.mxu0 %v34
  %457 = vmatmul.mubr.f32.gmra.mxu0 %v31
  %v458 = vpop.f32.mrf.mxu0
  %v459 = vadd.f32 %v389, %v458
  %v460 = vpop.f32.mrf.mxu0
  %461 = vdwg.mxu0
  %462 = vmatprep.subr.mxu0 0.0
  %463 = vmatpush1.msra.mxu0 %v181
  %464 = vmatprep.subr.mxu0 0.0
  %465 = vmatpush1.msra.mxu0 %v180
  %466 = vmatprep.subr.mxu0 0.0
  %467 = vmatpush1.msra.mxu0 %v179
  %468 = vmatprep.subr.mxu0 0.0
  %469 = vmatpush1.msra.mxu0 %v178
  %470 = vmatprep.subr.mxu0 0.0
  %471 = vmatpush1.msra.mxu0 %v177
  %472 = vmatprep.subr.mxu0 0.0
  %473 = vmatpush1.msra.mxu0 %v176
  %474 = vmatprep.subr.mxu0 0.0
  %475 = vmatpush1.msra.mxu0 %v175
  %476 = vmatprep.subr.mxu0 0.0
  %477 = vmatpush1.msra.mxu0 %v174
  %478 = vmatprep.subr.mxu0 0.0
  %479 = vmatpush1.msra.mxu0 %v173
  %480 = vmatprep.subr.mxu0 0.0
  %481 = vmatpush1.msra.mxu0 %v172
  %482 = vmatprep.subr.mxu0 0.0
  %483 = vmatpush1.msra.mxu0 %v171
  %484 = vmatprep.subr.mxu0 0.0
  %485 = vmatpush1.msra.mxu0 %v170
  %486 = vmatprep.subr.mxu0 0.0
  %487 = vmatpush1.msra.mxu0 %v169
  %488 = vmatprep.subr.mxu0 0.0
  %489 = vmatpush1.msra.mxu0 %v168
  %490 = vmatprep.subr.mxu0 0.0
  %491 = vmatpush1.msra.mxu0 %v167
  %492 = vmatprep.subr.mxu0 0.0
  %493 = vmatpush1.msra.mxu0 %v166
  %494 = vmatprep.subr.mxu0 0.0
  %495 = vmatpush2.msra.mxu0 0.0
  %496 = vmatprep.subr.mxu0 0.0
  %497 = vmatpush2.msra.mxu0 0.0
  %498 = vmatprep.subr.mxu0 0.0
  %499 = vmatpush2.msra.mxu0 0.0
  %500 = vmatprep.subr.mxu0 0.0
  %501 = vmatpush2.msra.mxu0 0.0
  %502 = vmatprep.subr.mxu0 0.0
  %503 = vmatpush2.msra.mxu0 0.0
  %504 = vmatprep.subr.mxu0 0.0
  %505 = vmatpush2.msra.mxu0 0.0
  %506 = vmatprep.subr.mxu0 0.0
  %507 = vmatpush2.msra.mxu0 0.0
  %508 = vmatprep.subr.mxu0 0.0
  %509 = vmatpush2.msra.mxu0 0.0
  %510 = vmatprep.subr.mxu0 0.0
  %511 = vmatpush2.msra.mxu0 0.0
  %512 = vmatprep.subr.mxu0 0.0
  %513 = vmatpush2.msra.mxu0 0.0
  %514 = vmatprep.subr.mxu0 0.0
  %515 = vmatpush2.msra.mxu0 0.0
  %516 = vmatprep.subr.mxu0 0.0
  %517 = vmatpush2.msra.mxu0 0.0
  %518 = vmatprep.subr.mxu0 0.0
  %519 = vmatpush2.msra.mxu0 0.0
  %520 = vmatprep.subr.mxu0 0.0
  %521 = vmatpush2.msra.mxu0 0.0
  %522 = vmatprep.subr.mxu0 0.0
  %523 = vmatpush2.msra.mxu0 0.0
  %524 = vmatprep.subr.mxu0 0.0
  %525 = vmatpush2.msra.mxu0 0.0
  %526 = vmatprep.mubr.f32.mxu0 0.0
  %527 = vmatmul.mubr.f32.gmra.mxu0 %v37
  %v528 = vpop.f32.mrf.mxu0
  %v529 = vadd.f32 %v459, %v528
  %v530 = vpop.f32.mrf.mxu0
  %531 = vdwg.mxu0
  %532 = vadd.xlane.f32.xlu0 %v14
  %v533 = vpop.xlane.xlu0 %532
  %v534 = vmax.f32 %v533, 1.0
  %v535 = vrcp.pop %v534
  %v536 = vmul.f32 %v529, %v535
  %vm537 = vcmask 261120
  %538 = vst.msk [vmem:[%s2] sm:$0xff] %vm537, %v536
  // Predicated region
  $region10: #{most_simple_cell_encoder.1} parent=0 // pred_check
    _
  $region11: #{most_simple_cell_encoder.1} parent=0 // pred_check_branch
    %540 = sbr.rel (0) target = $region13
  $region12: #{most_simple_cell_encoder.1} parent=0 // pred_region
    _
  $region13: #{most_simple_cell_encoder.1} parent=0 // pred_fallthru
    _
  // Predicated region
  $region14: #{most_simple_cell_encoder.1} parent=0 // pred_check
    _
  $region15: #{most_simple_cell_encoder.1} parent=0 // pred_check_branch
    %542 = sbr.rel (0) target = $region17
  $region16: #{most_simple_cell_encoder.1} parent=0 // pred_region
    _
  $region17: #{most_simple_cell_encoder.1} parent=0 // pred_fallthru
    _

</llo_original>
